<compile_context>
chip_gen: v6e
topology: v6e:2x2x1
jax: 0.10.0
libtpu: 0.0.40
codegen_flags: <defaults>
</compile_context>

<pallas_src>
import math
import numpy as np

import jax
import jax.numpy as jnp
from jax import lax
from jax.experimental import pallas as pl
from jax.experimental.pallas import tpu as pltpu

# ------------------------------ configuration ------------------------------
INPUT_SIZE = 32                          # input_size
HIDDEN_SIZE = 32                         # hidden_size
NUM_HEADS = 4
PROJ_FACTOR = 2
UP_SIZE = INPUT_SIZE * PROJ_FACTOR       # 64  (up_proj_left width)
HEAD_DIM = HIDDEN_SIZE // NUM_HEADS      # 8
BATCH = 8
_EPS = 1e-5


# ------------------------------ fused kernel -------------------------------
def mlstm_kernel(x_ref, c_ref, n_ref, m_ref,
                 ln_w_ref, ln_b_ref,
                 w1_ref, b1_ref,
                 w2_ref, b2_ref,
                 gg_ref, gn_w_ref, gn_b_ref,
                 wd_ref, bd_ref,
                 y_ref, h_out_ref, c_out_ref, n_out_ref, m_out_ref):
    B = x_ref.shape[0]
    H = c_ref.shape[1]
    UP = w2_ref.shape[0] // 2            # 64

    x = x_ref[...]

    # ---- LayerNorm over the feature axis (biased var, eps=1e-5, affine)
    mu = jnp.mean(x, axis=-1, keepdims=True)
    xc = x - mu
    var = jnp.mean(xc * xc, axis=-1, keepdims=True)
    xn = xc * lax.rsqrt(var + _EPS) * ln_w_ref[...] + ln_b_ref[...]

    # ---- fused projection 1 from x_norm:
    #      [x_up_left | causal_conv(x_up_left) | x_up_right]
    p1 = jnp.dot(xn, w1_ref[...], preferred_element_type=jnp.float32) + b1_ref[...]
    x_up_right = p1[:, 2 * UP:2 * UP + H]            # lane-aligned slice at 128

    # ---- masked SiLU: lanes [0,UP) carry x_up_left (identity),
    #      lanes [UP,2UP) carry the conv output -> SiLU.  Avoids slicing the
    #      two halves apart; the full 128-lane vreg feeds the stage-2 matmul.
    pre = p1[:, :2 * UP]
    lane = lax.broadcasted_iota(jnp.int32, (B, 2 * UP), 1)
    vec = jnp.where(lane >= UP, pre * jax.nn.sigmoid(pre), pre)

    # ---- fused projection 2 over [x_up_left | x_conv] (K = 128, one MXU pass):
    #      [skip | q | k/sqrt(hd) | i~ | f~ | v | o~]
    p2 = jnp.dot(vec, w2_ref[...], preferred_element_type=jnp.float32) + b2_ref[...]
    x_skip = p2[:, 0 * H:1 * H]
    q = p2[:, 1 * H:2 * H]
    k = p2[:, 2 * H:3 * H]          # 1/sqrt(head_dim) already folded into W/b
    i_tilde = p2[:, 3 * H:4 * H]
    f_tilde = p2[:, 4 * H:5 * H]
    v = p2[:, 5 * H:6 * H]
    o = jax.nn.sigmoid(p2[:, 6 * H:7 * H])

    # ---- exponential gating with stabilizer state m
    m_prev = m_ref[...]
    m_t = jnp.maximum(f_tilde + m_prev, i_tilde)
    i_g = jnp.exp(i_tilde - m_t)
    f_g = jnp.exp(f_tilde + m_prev - m_t)
    c_t = f_g * c_ref[...] + i_g * (v * k)
    n_t = f_g * n_ref[...] + i_g * k

    # ---- h_t = o * (c_t*q) / max_b |(n_t^T q)[h, b]|
    # scores[p, a] = sum_B q[B, p] * n_t[B, a]  ( == (n_t^T q)^T )
    scores = lax.dot_general(q, n_t, (((0,), (0,)), ((), ())),
                             preferred_element_type=jnp.float32)   # (H, H)
    denom = jnp.max(jnp.abs(scores), axis=0, keepdims=True)        # (1, H)
    h_t = o * (c_t * q) / denom

    # ---- GroupNorm(num_heads) via a per-group averaging matmul (GG = 1/hd mask)
    gmean = jnp.dot(h_t, gg_ref[...], preferred_element_type=jnp.float32)
    gex2 = jnp.dot(h_t * h_t, gg_ref[...], preferred_element_type=jnp.float32)
    gvar = gex2 - gmean * gmean
    gn = (h_t - gmean) * lax.rsqrt(gvar + _EPS) * gn_w_ref[...] + gn_b_ref[...]

    # ---- skip, SiLU gate, down-projection, residual
    gated = (gn + x_skip) * (x_up_right * jax.nn.sigmoid(x_up_right))
    y = jnp.dot(gated, wd_ref[...], preferred_element_type=jnp.float32) + bd_ref[...] + x

    y_ref[...] = y
    h_out_ref[...] = h_t
    c_out_ref[...] = c_t
    n_out_ref[...] = n_t
    m_out_ref[...] = m_t


# ------------------------------ wrapper ------------------------------------
_VMEM = pl.BlockSpec(memory_space=pltpu.MemorySpace.VMEM)


@jax.jit
def mlstm_forward(kp, x, prev_state):
    h_prev, c_prev, n_prev, m_prev = prev_state   # h_prev is unused by the block math
    del h_prev
    B, I = x.shape
    H = c_prev.shape[1]
    outs = pl.pallas_call(
        mlstm_kernel,
        out_shape=(
            jax.ShapeDtypeStruct((B, I), jnp.float32),    # final_output
            jax.ShapeDtypeStruct((B, H), jnp.float32),    # h_t
            jax.ShapeDtypeStruct((B, H), jnp.float32),    # c_t
            jax.ShapeDtypeStruct((B, H), jnp.float32),    # n_t
            jax.ShapeDtypeStruct((B, H), jnp.float32),    # m_t
        ),
        in_specs=[_VMEM] * 15,
        out_specs=(_VMEM,) * 5,
    )(x, c_prev, n_prev, m_prev,
      kp["ln_w"], kp["ln_b"], kp["w1"], kp["b1"],
      kp["w2"], kp["b2"],
      kp["gg"], kp["gn_w"], kp["gn_b"], kp["wd"], kp["bd"])
    y, h_t, c_t, n_t, m_t = outs
    return y, (h_t, c_t, n_t, m_t)


# -------------------- one-time host-side parameter packing -----------------
def prepare_kernel_params(p):
    """Transpose / fuse / fold weights once, outside the per-call path."""
    H, UP = HIDDEN_SIZE, UP_SIZE

    # CausalConv1D(1,1,4) along the feature axis as a banded (UP, UP) matrix:
    # y[:, j] = conv_b + sum_t w[t] * x[:, j - 3 + t]
    w = np.asarray(p["conv_w"])
    Mc = np.zeros((UP, UP), np.float32)
    for j in range(UP):
        for t in range(4):
            i = j - 3 + t
            if 0 <= i < UP:
                Mc[i, j] = w[t]
    Mc = jnp.asarray(Mc)

    # stage 1: x_norm -> [x_up_left | conv(x_up_left) | x_up_right]
    w1 = jnp.concatenate([p["WupL"].T, p["WupL"].T @ Mc, p["WupR"].T], axis=1)
    b1 = jnp.concatenate([p["bupL"], p["bupL"] @ Mc + p["conv_b"], p["bupR"]])[None, :]

    # stage 2: [x_up_left | x_conv] -> [skip | q | k*s | i | f | v | o]
    s = 1.0 / math.sqrt(HEAD_DIM)
    w2 = np.zeros((2 * UP, 7 * H), np.float32)
    # rows [UP, 2UP)  (x_conv)    drive skip, q, k, i, f
    w2[UP:, 0:5 * H] = np.concatenate(
        [np.asarray(p["Wskip"]).T, np.asarray(p["Wq"]).T,
         np.asarray(p["Wk"]).T * s, np.asarray(p["Wi"]).T,
         np.asarray(p["Wf"]).T], axis=1)
    # rows [0, UP)    (x_up_left) drive v, o
    w2[:UP, 5 * H:7 * H] = np.concatenate(
        [np.asarray(p["Wv"]).T, np.asarray(p["Wo"]).T], axis=1)
    b2 = jnp.concatenate(
        [p["bskip"], p["bq"], p["bk"] * s, p["bi"], p["bf"],
         p["bv"], p["bo"]])[None, :]

    # GroupNorm group-averaging matrix (block-diagonal 1/head_dim)
    gg = jnp.asarray(
        np.kron(np.eye(NUM_HEADS, dtype=np.float32),
                np.full((HEAD_DIM, HEAD_DIM), 1.0 / HEAD_DIM, np.float32)))

    return {
        "ln_w": p["ln_w"][None, :], "ln_b": p["ln_b"][None, :],
        "w1": w1, "b1": b1,
        "w2": jnp.asarray(w2), "b2": b2,
        "gg": gg, "gn_w": p["gn_w"][None, :], "gn_b": p["gn_b"][None, :],
        "wd": p["Wdown"].T, "bd": p["bdown"][None, :],
    }


# -------------------- PyTorch-shaped parameter construction ----------------
def init_params(key):
    ks = iter(jax.random.split(key, 32))

    def uni(shape, scale):
        return jax.random.uniform(next(ks), shape, jnp.float32, -scale, scale)

    def linear(in_f, out_f):
        s = 1.0 / math.sqrt(in_f)
        return uni((out_f, in_f), s), uni((out_f,), s)

    def block_diag_linear(in_f, out_f, nb):
        bi, bo = in_f // nb, out_f // nb
        s = 1.0 / math.sqrt(bi)
        blocks = np.asarray(uni((nb, bo, bi), s))
        W = np.zeros((out_f, in_f), np.float32)
        for g in range(nb):
            W[g * bo:(g + 1) * bo, g * bi:(g + 1) * bi] = blocks[g]
        return jnp.asarray(W), uni((out_f,), s)

    p = {}
    p["ln_w"] = 1.0 + uni((INPUT_SIZE,), 0.2)
    p["ln_b"] = uni((INPUT_SIZE,), 0.1)
    p["WupL"], p["bupL"] = linear(INPUT_SIZE, UP_SIZE)
    p["WupR"], p["bupR"] = linear(INPUT_SIZE, HIDDEN_SIZE)
    p["Wdown"], p["bdown"] = linear(HIDDEN_SIZE, INPUT_SIZE)
    p["conv_w"] = uni((4,), 0.5)
    p["conv_b"] = uni((1,), 0.5)
    p["Wskip"], p["bskip"] = linear(UP_SIZE, HIDDEN_SIZE)
    p["Wq"], p["bq"] = block_diag_linear(UP_SIZE, HIDDEN_SIZE, NUM_HEADS)
    p["Wk"], p["bk"] = block_diag_linear(UP_SIZE, HIDDEN_SIZE, NUM_HEADS)
    p["Wv"], p["bv"] = block_diag_linear(UP_SIZE, HIDDEN_SIZE, NUM_HEADS)
    p["Wi"], p["bi"] = linear(UP_SIZE, HIDDEN_SIZE)
    p["Wf"], p["bf"] = linear(UP_SIZE, HIDDEN_SIZE)
    p["Wo"], p["bo"] = linear(UP_SIZE, HIDDEN_SIZE)
    p["gn_w"] = 1.0 + uni((HIDDEN_SIZE,), 0.2)
    p["gn_b"] = uni((HIDDEN_SIZE,), 0.1)
    return p


# --------------------------- pure-JAX reference ----------------------------
def mlstm_block_ref(x, prev_state, p, num_heads):
    h_prev, c_prev, n_prev, m_prev = prev_state
    del h_prev
    H = p["WupR"].shape[0]
    UP = p["WupL"].shape[0]
    hd = H // num_heads
    # LayerNorm
    mu = jnp.mean(x, -1, keepdims=True)
    var = jnp.mean((x - mu) ** 2, -1, keepdims=True)
    xn = (x - mu) / jnp.sqrt(var + _EPS) * p["ln_w"] + p["ln_b"]
    x_up_left = xn @ p["WupL"].T + p["bupL"]
    x_up_right = xn @ p["WupR"].T + p["bupR"]
    # causal conv along the feature axis (Conv1d(1,1,4, pad=3), then truncate)
    xp = jnp.pad(x_up_left, ((0, 0), (3, 0)))
    conv = p["conv_b"] + sum(p["conv_w"][t] * xp[:, t:t + UP] for t in range(4))
    x_conv = jax.nn.silu(conv)
    x_skip = x_conv @ p["Wskip"].T + p["bskip"]
    q = x_conv @ p["Wq"].T + p["bq"]
    k = (x_conv @ p["Wk"].T + p["bk"]) / math.sqrt(hd)
    v = x_up_left @ p["Wv"].T + p["bv"]
    i_tilde = x_conv @ p["Wi"].T + p["bi"]
    f_tilde = x_conv @ p["Wf"].T + p["bf"]
    o = jax.nn.sigmoid(x_up_left @ p["Wo"].T + p["bo"])
    m_t = jnp.maximum(f_tilde + m_prev, i_tilde)
    i_g = jnp.exp(i_tilde - m_t)
    f_g = jnp.exp(f_tilde + m_prev - m_t)
    c_t = f_g * c_prev + i_g * (v * k)
    n_t = f_g * n_prev + i_g * k
    denom = jnp.max(jnp.abs(n_t.T @ q), axis=1)            # (H,)
    h_t = o * (c_t * q) / denom
    # GroupNorm(num_heads)
    hg = h_t.reshape(-1, num_heads, hd)
    gm = hg.mean(-1, keepdims=True)
    gv = ((hg - gm) ** 2).mean(-1, keepdims=True)
    gn = ((hg - gm) / jnp.sqrt(gv + _EPS)).reshape(-1, H) * p["gn_w"] + p["gn_b"]
    out = (gn + x_skip) * jax.nn.silu(x_up_right)
    out = out @ p["Wdown"].T + p["bdown"]
    return out + x, (h_t, c_t, n_t, m_t)


# --------------------------------- main -------------------------------------
if __name__ == "__main__":
    key = jax.random.PRNGKey(0)
    kp_key, kx, kc, kn, km = jax.random.split(key, 5)
    params = init_params(kp_key)
    kparams = prepare_kernel_params(params)          # one-time weight packing

    x = jax.random.normal(kx, (BATCH, INPUT_SIZE), jnp.float32)
    h_prev = jnp.zeros((BATCH, HIDDEN_SIZE), jnp.float32)
    c_prev = 0.5 * jax.random.normal(kc, (BATCH, HIDDEN_SIZE), jnp.float32)
    n_prev = 0.5 * jax.random.normal(kn, (BATCH, HIDDEN_SIZE), jnp.float32)
    m_prev = 0.5 * jax.random.normal(km, (BATCH, HIDDEN_SIZE), jnp.float32)
    state = (h_prev, c_prev, n_prev, m_prev)

    y, new_state = mlstm_forward(kparams, x, state)
    y = jax.block_until_ready(y)

    # correctness check against a literal pure-JAX transcription of the module
    y_ref, state_ref = mlstm_block_ref(x, state, params, NUM_HEADS)
    assert y.shape == (BATCH, INPUT_SIZE)
    assert jnp.allclose(y, y_ref, atol=2e-3, rtol=2e-3), \
        float(jnp.max(jnp.abs(y - y_ref)))
    for got, ref in zip(new_state, state_ref):
        assert jnp.allclose(got, ref, atol=2e-3, rtol=2e-3), \
            float(jnp.max(jnp.abs(got - ref)))

    print("KERNEL_OK")
</pallas_src>

<mosaic_0001>
module attributes {stable_mosaic.version = 11 : i64} {
  func.func @mlstm_kernel(%arg0: memref<8x32xf32, #tpu.memory_space<vmem>>, %arg1: memref<8x32xf32, #tpu.memory_space<vmem>>, %arg2: memref<8x32xf32, #tpu.memory_space<vmem>>, %arg3: memref<8x32xf32, #tpu.memory_space<vmem>>, %arg4: memref<1x32xf32, #tpu.memory_space<vmem>>, %arg5: memref<1x32xf32, #tpu.memory_space<vmem>>, %arg6: memref<32x160xf32, #tpu.memory_space<vmem>>, %arg7: memref<1x160xf32, #tpu.memory_space<vmem>>, %arg8: memref<128x224xf32, #tpu.memory_space<vmem>>, %arg9: memref<1x224xf32, #tpu.memory_space<vmem>>, %arg10: memref<32x32xf32, #tpu.memory_space<vmem>>, %arg11: memref<1x32xf32, #tpu.memory_space<vmem>>, %arg12: memref<1x32xf32, #tpu.memory_space<vmem>>, %arg13: memref<32x32xf32, #tpu.memory_space<vmem>>, %arg14: memref<1x32xf32, #tpu.memory_space<vmem>>, %arg15: memref<8x32xf32, #tpu.memory_space<vmem>>, %arg16: memref<8x32xf32, #tpu.memory_space<vmem>>, %arg17: memref<8x32xf32, #tpu.memory_space<vmem>>, %arg18: memref<8x32xf32, #tpu.memory_space<vmem>>, %arg19: memref<8x32xf32, #tpu.memory_space<vmem>>) attributes {dimension_semantics = [], scalar_prefetch = 0 : i64, scratch_operands = 0 : i64, tpu.core_type = #tpu.core_type<tc>} {
    %c0 = arith.constant 0 : index
    %c0_0 = arith.constant 0 : index
    %0 = vector.load %arg0[%c0, %c0_0] : memref<8x32xf32, #tpu.memory_space<vmem>>, vector<8x32xf32>
    %cst = arith.constant dense<0.000000e+00> : vector<8xf32>
    %1 = vector.multi_reduction <add>, %0, %cst [1] : vector<8x32xf32> to vector<8xf32>
    %2 = vector.shape_cast %1 : vector<8xf32> to vector<8x1xf32>
    %cst_1 = arith.constant 3.200000e+01 : f32
    %3 = vector.broadcast %cst_1 : f32 to vector<8x1xf32>
    %4 = arith.divf %2, %3 : vector<8x1xf32>
    %5 = vector.broadcast %4 : vector<8x1xf32> to vector<8x32xf32>
    %6 = arith.subf %0, %5 : vector<8x32xf32>
    %7 = arith.mulf %6, %6 : vector<8x32xf32>
    %cst_2 = arith.constant dense<0.000000e+00> : vector<8xf32>
    %8 = vector.multi_reduction <add>, %7, %cst_2 [1] : vector<8x32xf32> to vector<8xf32>
    %9 = vector.shape_cast %8 : vector<8xf32> to vector<8x1xf32>
    %cst_3 = arith.constant 3.200000e+01 : f32
    %10 = vector.broadcast %cst_3 : f32 to vector<8x1xf32>
    %11 = arith.divf %9, %10 : vector<8x1xf32>
    %cst_4 = arith.constant 9.99999974E-6 : f32
    %12 = vector.broadcast %cst_4 : f32 to vector<8x1xf32>
    %13 = arith.addf %11, %12 : vector<8x1xf32>
    %14 = math.rsqrt %13 : vector<8x1xf32>
    %15 = vector.broadcast %14 : vector<8x1xf32> to vector<8x32xf32>
    %16 = arith.mulf %6, %15 : vector<8x32xf32>
    %c0_5 = arith.constant 0 : index
    %c0_6 = arith.constant 0 : index
    %17 = vector.load %arg4[%c0_5, %c0_6] : memref<1x32xf32, #tpu.memory_space<vmem>>, vector<1x32xf32>
    %18 = vector.broadcast %17 : vector<1x32xf32> to vector<8x32xf32>
    %19 = arith.mulf %16, %18 : vector<8x32xf32>
    %c0_7 = arith.constant 0 : index
    %c0_8 = arith.constant 0 : index
    %20 = vector.load %arg5[%c0_7, %c0_8] : memref<1x32xf32, #tpu.memory_space<vmem>>, vector<1x32xf32>
    %21 = vector.broadcast %20 : vector<1x32xf32> to vector<8x32xf32>
    %22 = arith.addf %19, %21 : vector<8x32xf32>
    %c0_9 = arith.constant 0 : index
    %c0_10 = arith.constant 0 : index
    %23 = vector.load %arg6[%c0_9, %c0_10] : memref<32x160xf32, #tpu.memory_space<vmem>>, vector<32x160xf32>
    %cst_11 = arith.constant dense<0.000000e+00> : vector<8x160xf32>
    %24 = tpu.matmul %22, %23, %cst_11 {dimension_numbers = #tpu.dot_dimension_numbers<[1], [0], [0], [1], [0, 0, 1, 1], [], []>} : vector<8x32xf32>, vector<32x160xf32>, vector<8x160xf32> -> vector<8x160xf32>
    %c0_12 = arith.constant 0 : index
    %c0_13 = arith.constant 0 : index
    %25 = vector.load %arg7[%c0_12, %c0_13] : memref<1x160xf32, #tpu.memory_space<vmem>>, vector<1x160xf32>
    %26 = vector.broadcast %25 : vector<1x160xf32> to vector<8x160xf32>
    %27 = arith.addf %24, %26 : vector<8x160xf32>
    %28 = vector.extract_strided_slice %27 {offsets = [0, 128], sizes = [8, 32], strides = [1, 1]} : vector<8x160xf32> to vector<8x32xf32>
    %29 = vector.extract_strided_slice %27 {offsets = [0, 0], sizes = [8, 128], strides = [1, 1]} : vector<8x160xf32> to vector<8x128xf32>
    %30 = tpu.iota {dimensions = array<i32: 1>} : vector<8x128xi32>
    %c64_i32 = arith.constant 64 : i32
    %31 = vector.broadcast %c64_i32 : i32 to vector<8x128xi32>
    %32 = arith.cmpi sge, %30, %31 : vector<8x128xi32>
    %33 = arith.negf %29 : vector<8x128xf32>
    %34 = math.exp %33 : vector<8x128xf32>
    %cst_14 = arith.constant 1.000000e+00 : f32
    %35 = vector.broadcast %cst_14 : f32 to vector<8x128xf32>
    %36 = arith.addf %35, %34 : vector<8x128xf32>
    %37 = arith.divf %35, %36 : vector<8x128xf32>
    %38 = arith.mulf %29, %37 : vector<8x128xf32>
    %39 = arith.select %32, %38, %29 : vector<8x128xi1>, vector<8x128xf32>
    %c0_15 = arith.constant 0 : index
    %c0_16 = arith.constant 0 : index
    %40 = vector.load %arg8[%c0_15, %c0_16] : memref<128x224xf32, #tpu.memory_space<vmem>>, vector<128x224xf32>
    %cst_17 = arith.constant dense<0.000000e+00> : vector<8x224xf32>
    %41 = tpu.matmul %39, %40, %cst_17 {dimension_numbers = #tpu.dot_dimension_numbers<[1], [0], [0], [1], [0, 0, 1, 1], [], []>} : vector<8x128xf32>, vector<128x224xf32>, vector<8x224xf32> -> vector<8x224xf32>
    %c0_18 = arith.constant 0 : index
    %c0_19 = arith.constant 0 : index
    %42 = vector.load %arg9[%c0_18, %c0_19] : memref<1x224xf32, #tpu.memory_space<vmem>>, vector<1x224xf32>
    %43 = vector.broadcast %42 : vector<1x224xf32> to vector<8x224xf32>
    %44 = arith.addf %41, %43 : vector<8x224xf32>
    %45 = vector.extract_strided_slice %44 {offsets = [0, 0], sizes = [8, 32], strides = [1, 1]} : vector<8x224xf32> to vector<8x32xf32>
    %46 = vector.extract_strided_slice %44 {offsets = [0, 32], sizes = [8, 32], strides = [1, 1]} : vector<8x224xf32> to vector<8x32xf32>
    %47 = vector.extract_strided_slice %44 {offsets = [0, 64], sizes = [8, 32], strides = [1, 1]} : vector<8x224xf32> to vector<8x32xf32>
    %48 = vector.extract_strided_slice %44 {offsets = [0, 96], sizes = [8, 32], strides = [1, 1]} : vector<8x224xf32> to vector<8x32xf32>
    %49 = vector.extract_strided_slice %44 {offsets = [0, 128], sizes = [8, 32], strides = [1, 1]} : vector<8x224xf32> to vector<8x32xf32>
    %50 = vector.extract_strided_slice %44 {offsets = [0, 160], sizes = [8, 32], strides = [1, 1]} : vector<8x224xf32> to vector<8x32xf32>
    %51 = vector.extract_strided_slice %44 {offsets = [0, 192], sizes = [8, 32], strides = [1, 1]} : vector<8x224xf32> to vector<8x32xf32>
    %52 = arith.negf %51 : vector<8x32xf32>
    %53 = math.exp %52 : vector<8x32xf32>
    %cst_20 = arith.constant 1.000000e+00 : f32
    %54 = vector.broadcast %cst_20 : f32 to vector<8x32xf32>
    %55 = arith.addf %54, %53 : vector<8x32xf32>
    %56 = arith.divf %54, %55 : vector<8x32xf32>
    %c0_21 = arith.constant 0 : index
    %c0_22 = arith.constant 0 : index
    %57 = vector.load %arg3[%c0_21, %c0_22] : memref<8x32xf32, #tpu.memory_space<vmem>>, vector<8x32xf32>
    %58 = arith.addf %49, %57 : vector<8x32xf32>
    %59 = arith.maximumf %58, %48 : vector<8x32xf32>
    %60 = arith.subf %48, %59 : vector<8x32xf32>
    %61 = math.exp %60 : vector<8x32xf32>
    %62 = arith.addf %49, %57 : vector<8x32xf32>
    %63 = arith.subf %62, %59 : vector<8x32xf32>
    %64 = math.exp %63 : vector<8x32xf32>
    %c0_23 = arith.constant 0 : index
    %c0_24 = arith.constant 0 : index
    %65 = vector.load %arg1[%c0_23, %c0_24] : memref<8x32xf32, #tpu.memory_space<vmem>>, vector<8x32xf32>
    %66 = arith.mulf %64, %65 : vector<8x32xf32>
    %67 = arith.mulf %50, %47 : vector<8x32xf32>
    %68 = arith.mulf %61, %67 : vector<8x32xf32>
    %69 = arith.addf %66, %68 : vector<8x32xf32>
    %c0_25 = arith.constant 0 : index
    %c0_26 = arith.constant 0 : index
    %70 = vector.load %arg2[%c0_25, %c0_26] : memref<8x32xf32, #tpu.memory_space<vmem>>, vector<8x32xf32>
    %71 = arith.mulf %64, %70 : vector<8x32xf32>
    %72 = arith.mulf %61, %47 : vector<8x32xf32>
    %73 = arith.addf %71, %72 : vector<8x32xf32>
    %cst_27 = arith.constant dense<0.000000e+00> : vector<32x32xf32>
    %74 = tpu.matmul %46, %73, %cst_27 {dimension_numbers = #tpu.dot_dimension_numbers<[0], [0], [1], [1], [0, 1, 1, 1], [], []>} : vector<8x32xf32>, vector<8x32xf32>, vector<32x32xf32> -> vector<32x32xf32>
    %75 = math.absf %74 : vector<32x32xf32>
    %cst_28 = arith.constant dense<0xFF800000> : vector<32xf32>
    %76 = vector.multi_reduction <maximumf>, %75, %cst_28 [0] : vector<32x32xf32> to vector<32xf32>
    %77 = vector.shape_cast %76 : vector<32xf32> to vector<1x32xf32>
    %78 = arith.mulf %69, %46 : vector<8x32xf32>
    %79 = arith.mulf %56, %78 : vector<8x32xf32>
    %80 = vector.broadcast %77 : vector<1x32xf32> to vector<8x32xf32>
    %81 = arith.divf %79, %80 : vector<8x32xf32>
    %c0_29 = arith.constant 0 : index
    %c0_30 = arith.constant 0 : index
    %82 = vector.load %arg10[%c0_29, %c0_30] : memref<32x32xf32, #tpu.memory_space<vmem>>, vector<32x32xf32>
    %cst_31 = arith.constant dense<0.000000e+00> : vector<8x32xf32>
    %83 = tpu.matmul %81, %82, %cst_31 {dimension_numbers = #tpu.dot_dimension_numbers<[1], [0], [0], [1], [0, 0, 1, 1], [], []>} : vector<8x32xf32>, vector<32x32xf32>, vector<8x32xf32> -> vector<8x32xf32>
    %84 = arith.mulf %81, %81 : vector<8x32xf32>
    %c0_32 = arith.constant 0 : index
    %c0_33 = arith.constant 0 : index
    %85 = vector.load %arg10[%c0_32, %c0_33] : memref<32x32xf32, #tpu.memory_space<vmem>>, vector<32x32xf32>
    %cst_34 = arith.constant dense<0.000000e+00> : vector<8x32xf32>
    %86 = tpu.matmul %84, %85, %cst_34 {dimension_numbers = #tpu.dot_dimension_numbers<[1], [0], [0], [1], [0, 0, 1, 1], [], []>} : vector<8x32xf32>, vector<32x32xf32>, vector<8x32xf32> -> vector<8x32xf32>
    %87 = arith.mulf %83, %83 : vector<8x32xf32>
    %88 = arith.subf %86, %87 : vector<8x32xf32>
    %89 = arith.subf %81, %83 : vector<8x32xf32>
    %cst_35 = arith.constant 9.99999974E-6 : f32
    %90 = vector.broadcast %cst_35 : f32 to vector<8x32xf32>
    %91 = arith.addf %88, %90 : vector<8x32xf32>
    %92 = math.rsqrt %91 : vector<8x32xf32>
    %93 = arith.mulf %89, %92 : vector<8x32xf32>
    %c0_36 = arith.constant 0 : index
    %c0_37 = arith.constant 0 : index
    %94 = vector.load %arg11[%c0_36, %c0_37] : memref<1x32xf32, #tpu.memory_space<vmem>>, vector<1x32xf32>
    %95 = vector.broadcast %94 : vector<1x32xf32> to vector<8x32xf32>
    %96 = arith.mulf %93, %95 : vector<8x32xf32>
    %c0_38 = arith.constant 0 : index
    %c0_39 = arith.constant 0 : index
    %97 = vector.load %arg12[%c0_38, %c0_39] : memref<1x32xf32, #tpu.memory_space<vmem>>, vector<1x32xf32>
    %98 = vector.broadcast %97 : vector<1x32xf32> to vector<8x32xf32>
    %99 = arith.addf %96, %98 : vector<8x32xf32>
    %100 = arith.addf %99, %45 : vector<8x32xf32>
    %101 = arith.negf %28 : vector<8x32xf32>
    %102 = math.exp %101 : vector<8x32xf32>
    %cst_40 = arith.constant 1.000000e+00 : f32
    %103 = vector.broadcast %cst_40 : f32 to vector<8x32xf32>
    %104 = arith.addf %103, %102 : vector<8x32xf32>
    %105 = arith.divf %103, %104 : vector<8x32xf32>
    %106 = arith.mulf %28, %105 : vector<8x32xf32>
    %107 = arith.mulf %100, %106 : vector<8x32xf32>
    %c0_41 = arith.constant 0 : index
    %c0_42 = arith.constant 0 : index
    %108 = vector.load %arg13[%c0_41, %c0_42] : memref<32x32xf32, #tpu.memory_space<vmem>>, vector<32x32xf32>
    %cst_43 = arith.constant dense<0.000000e+00> : vector<8x32xf32>
    %109 = tpu.matmul %107, %108, %cst_43 {dimension_numbers = #tpu.dot_dimension_numbers<[1], [0], [0], [1], [0, 0, 1, 1], [], []>} : vector<8x32xf32>, vector<32x32xf32>, vector<8x32xf32> -> vector<8x32xf32>
    %c0_44 = arith.constant 0 : index
    %c0_45 = arith.constant 0 : index
    %110 = vector.load %arg14[%c0_44, %c0_45] : memref<1x32xf32, #tpu.memory_space<vmem>>, vector<1x32xf32>
    %111 = vector.broadcast %110 : vector<1x32xf32> to vector<8x32xf32>
    %112 = arith.addf %109, %111 : vector<8x32xf32>
    %113 = arith.addf %112, %0 : vector<8x32xf32>
    %c0_46 = arith.constant 0 : index
    %c0_47 = arith.constant 0 : index
    %114 = vector.load %arg15[%c0_46, %c0_47] : memref<8x32xf32, #tpu.memory_space<vmem>>, vector<8x32xf32>
    tpu.vector_store %arg15[%c0_46, %c0_47], %113 {strides = array<i32>} : memref<8x32xf32, #tpu.memory_space<vmem>>, vector<8x32xf32>,
    %c0_48 = arith.constant 0 : index
    %c0_49 = arith.constant 0 : index
    %115 = vector.load %arg16[%c0_48, %c0_49] : memref<8x32xf32, #tpu.memory_space<vmem>>, vector<8x32xf32>
    tpu.vector_store %arg16[%c0_48, %c0_49], %81 {strides = array<i32>} : memref<8x32xf32, #tpu.memory_space<vmem>>, vector<8x32xf32>,
    %c0_50 = arith.constant 0 : index
    %c0_51 = arith.constant 0 : index
    %116 = vector.load %arg17[%c0_50, %c0_51] : memref<8x32xf32, #tpu.memory_space<vmem>>, vector<8x32xf32>
    tpu.vector_store %arg17[%c0_50, %c0_51], %69 {strides = array<i32>} : memref<8x32xf32, #tpu.memory_space<vmem>>, vector<8x32xf32>,
    %c0_52 = arith.constant 0 : index
    %c0_53 = arith.constant 0 : index
    %117 = vector.load %arg18[%c0_52, %c0_53] : memref<8x32xf32, #tpu.memory_space<vmem>>, vector<8x32xf32>
    tpu.vector_store %arg18[%c0_52, %c0_53], %73 {strides = array<i32>} : memref<8x32xf32, #tpu.memory_space<vmem>>, vector<8x32xf32>,
    %c0_54 = arith.constant 0 : index
    %c0_55 = arith.constant 0 : index
    %118 = vector.load %arg19[%c0_54, %c0_55] : memref<8x32xf32, #tpu.memory_space<vmem>>, vector<8x32xf32>
    tpu.vector_store %arg19[%c0_54, %c0_55], %59 {strides = array<i32>} : memref<8x32xf32, #tpu.memory_space<vmem>>, vector<8x32xf32>,
    return
  }
}

</mosaic_0001>

<llo_original>
// kernel: mlstm_forward.1
$region0: #{mlstm_forward.1}
  #allocation0 [shape = 'u32[]', space=smem, size = 0x4, offset = 0x4, fixed_abs, tag = 'smem constant byte address 0x4 - core index']
  #allocation1 [shape = 'u32[144,128]{1,0:T(1,128)}', space=vmem, size = 0x12000, scoped, tag = 'internal scratch']
  %s0 = inlined_call_operand.vmem [shape: f32[8,32], index: 0, kind: input, shape index: {}]
  %s1 = inlined_call_operand.vmem [shape: f32[8,32], index: 1, kind: input, shape index: {}]
  %s2 = inlined_call_operand.vmem [shape: f32[8,32], index: 2, kind: input, shape index: {}]
  %s3 = inlined_call_operand.vmem [shape: f32[8,32], index: 3, kind: input, shape index: {}]
  %s4 = inlined_call_operand.vmem [shape: f32[1,32], index: 4, kind: input, shape index: {}]
  %s5 = inlined_call_operand.vmem [shape: f32[1,32], index: 5, kind: input, shape index: {}]
  %s6 = inlined_call_operand.vmem [shape: f32[32,160], index: 6, kind: input, shape index: {}]
  %s7 = inlined_call_operand.vmem [shape: f32[1,160], index: 7, kind: input, shape index: {}]
  %s8 = inlined_call_operand.vmem [shape: f32[128,224], index: 8, kind: input, shape index: {}]
  %s9 = inlined_call_operand.vmem [shape: f32[1,224], index: 9, kind: input, shape index: {}]
  %s10 = inlined_call_operand.vmem [shape: f32[32,32], index: 10, kind: input, shape index: {}]
  %s11 = inlined_call_operand.vmem [shape: f32[1,32], index: 11, kind: input, shape index: {}]
  %s12 = inlined_call_operand.vmem [shape: f32[1,32], index: 12, kind: input, shape index: {}]
  %s13 = inlined_call_operand.vmem [shape: f32[32,32], index: 13, kind: input, shape index: {}]
  %s14 = inlined_call_operand.vmem [shape: f32[1,32], index: 14, kind: input, shape index: {}]
  %s15 = inlined_call_operand.hbm [shape: f32[8,32], index: 15, kind: output, shape index: {0}]
  %s16 = inlined_call_operand.hbm [shape: f32[8,32], index: 16, kind: output, shape index: {1}]
  %s17 = inlined_call_operand.hbm [shape: f32[8,32], index: 17, kind: output, shape index: {2}]
  %s18 = inlined_call_operand.hbm [shape: f32[8,32], index: 18, kind: output, shape index: {3}]
  %s19 = inlined_call_operand.hbm [shape: f32[8,32], index: 19, kind: output, shape index: {4}]
  %20 = xla_tuple %s15, %s16, %s17, %s18, %s19
  %s21 = sld [smem:[#allocation0]]
  $region102: #{mlstm_forward.1} parent=0
    _
  %s23 = ssub.s32 1, %s21
  %s24 = scalar_select 0, %s23, %s21
  $region1: #{mlstm_forward.1} parent=0
    #allocation2 [shape = 'u8[4096]{0}', space=vmem, size = 0x1000, scoped, tag = 'output window, operand 0, single buffered']
    #allocation3 [shape = 's32[1]{0}', space=sflag, size = 0x4, scoped, tag = 'scoped memory for mlstm_forward.1']
    #allocation4 [shape = 'u8[4096]{0}', space=vmem, size = 0x1000, scoped, tag = 'output window, operand 1, single buffered']
    #allocation5 [shape = 's32[1]{0}', space=sflag, size = 0x4, scoped, tag = 'scoped memory for mlstm_forward.1']
    #allocation6 [shape = 'u8[4096]{0}', space=vmem, size = 0x1000, scoped, tag = 'output window, operand 2, single buffered']
    #allocation7 [shape = 'u8[4096]{0}', space=vmem, size = 0x1000, scoped, tag = 'output window, operand 3, single buffered']
    #allocation8 [shape = 's32[1]{0}', space=sflag, size = 0x4, scoped, tag = 'scoped memory for mlstm_forward.1']
    #allocation9 [shape = 'u8[4096]{0}', space=vmem, size = 0x1000, scoped, tag = 'output window, operand 4, single buffered']
    %25 = vsyncpa [#allocation3], 0
    %26 = vsyncpa [#allocation5], 0
    %27 = vsyncpa [#allocation8], 0
    // Predicated region
    $region2: #{mlstm_forward.1} parent=1 // pred_check
      _
    $region3: #{mlstm_forward.1} parent=1 // pred_check_branch
      %29 = sbr.rel (0) target = $region5
    $region4: #{mlstm_forward.1} parent=1 // pred_region
      _
    $region5: #{mlstm_forward.1} parent=1 // pred_fallthru
      _
    // Predicated region
    $region6: #{mlstm_forward.1} parent=1 // pred_check
      _
    $region7: #{mlstm_forward.1} parent=1 // pred_check_branch
      %31 = sbr.rel (0) target = $region9
    $region8: #{mlstm_forward.1} parent=1 // pred_region
      _
    $region9: #{mlstm_forward.1} parent=1 // pred_fallthru
      _
    // Predicated region
    $region10: #{mlstm_forward.1} parent=1 // pred_check
      _
    $region11: #{mlstm_forward.1} parent=1 // pred_check_branch
      %33 = sbr.rel (0) target = $region13
    $region12: #{mlstm_forward.1} parent=1 // pred_region
      _
    $region13: #{mlstm_forward.1} parent=1 // pred_fallthru
      _
    // Predicated region
    $region14: #{mlstm_forward.1} parent=1 // pred_check
      _
    $region15: #{mlstm_forward.1} parent=1 // pred_check_branch
      %35 = sbr.rel (0) target = $region17
    $region16: #{mlstm_forward.1} parent=1 // pred_region
      _
    $region17: #{mlstm_forward.1} parent=1 // pred_fallthru
      _
    // Predicated region
    $region18: #{mlstm_forward.1} parent=1 // pred_check
      _
    $region19: #{mlstm_forward.1} parent=1 // pred_check_branch
      %37 = sbr.rel (0) target = $region21
    $region20: #{mlstm_forward.1} parent=1 // pred_region
      _
    $region21: #{mlstm_forward.1} parent=1 // pred_fallthru
      _
    // Predicated region
    $region22: #{mlstm_forward.1} parent=1 // pred_check
      _
    $region23: #{mlstm_forward.1} parent=1 // pred_check_branch
      %39 = sbr.rel (0) target = $region25
    $region24: #{mlstm_forward.1} parent=1 // pred_region
      _
    $region25: #{mlstm_forward.1} parent=1 // pred_fallthru
      _
    // Predicated region
    $region26: #{mlstm_forward.1} parent=1 // pred_check
      _
    $region27: #{mlstm_forward.1} parent=1 // pred_check_branch
      %41 = sbr.rel (0) target = $region29
    $region28: #{mlstm_forward.1} parent=1 // pred_region
      _
    $region29: #{mlstm_forward.1} parent=1 // pred_fallthru
      _
    // Predicated region
    $region30: #{mlstm_forward.1} parent=1 // pred_check
      _
    $region31: #{mlstm_forward.1} parent=1 // pred_check_branch
      %43 = sbr.rel (0) target = $region33
    $region32: #{mlstm_forward.1} parent=1 // pred_region
      _
    $region33: #{mlstm_forward.1} parent=1 // pred_fallthru
      _
    // Predicated region
    $region34: #{mlstm_forward.1} parent=1 // pred_check
      _
    $region35: #{mlstm_forward.1} parent=1 // pred_check_branch
      %45 = sbr.rel (0) target = $region37
    $region36: #{mlstm_forward.1} parent=1 // pred_region
      _
    $region37: #{mlstm_forward.1} parent=1 // pred_fallthru
      _
    // Predicated region
    $region38: #{mlstm_forward.1} parent=1 // pred_check
      _
    $region39: #{mlstm_forward.1} parent=1 // pred_check_branch
      %47 = sbr.rel (0) target = $region41
    $region40: #{mlstm_forward.1} parent=1 // pred_region
      _
    $region41: #{mlstm_forward.1} parent=1 // pred_fallthru
      _
    // Predicated region
    $region42: #{mlstm_forward.1} parent=1 // pred_check
      _
    $region43: #{mlstm_forward.1} parent=1 // pred_check_branch
      %49 = sbr.rel (0) target = $region45
    $region44: #{mlstm_forward.1} parent=1 // pred_region
      _
    $region45: #{mlstm_forward.1} parent=1 // pred_fallthru
      _
    // Predicated region
    $region46: #{mlstm_forward.1} parent=1 // pred_check
      _
    $region47: #{mlstm_forward.1} parent=1 // pred_check_branch
      %51 = sbr.rel (0) target = $region49
    $region48: #{mlstm_forward.1} parent=1 // pred_region
      _
    $region49: #{mlstm_forward.1} parent=1 // pred_fallthru
      _
    // Predicated region
    $region50: #{mlstm_forward.1} parent=1 // pred_check
      _
    $region51: #{mlstm_forward.1} parent=1 // pred_check_branch
      %53 = sbr.rel (0) target = $region53
    $region52: #{mlstm_forward.1} parent=1 // pred_region
      _
    $region53: #{mlstm_forward.1} parent=1 // pred_fallthru
      _
    // Predicated region
    $region54: #{mlstm_forward.1} parent=1 // pred_check
      _
    $region55: #{mlstm_forward.1} parent=1 // pred_check_branch
      %55 = sbr.rel (0) target = $region57
    $region56: #{mlstm_forward.1} parent=1 // pred_region
      _
    $region57: #{mlstm_forward.1} parent=1 // pred_fallthru
      _
    // Predicated region
    $region58: #{mlstm_forward.1} parent=1 // pred_check
      _
    $region59: #{mlstm_forward.1} parent=1 // pred_check_branch
      %57 = sbr.rel (0) target = $region61
    $region60: #{mlstm_forward.1} parent=1 // pred_region
      _
    $region61: #{mlstm_forward.1} parent=1 // pred_fallthru
      _
    %v58 = vld [vmem:[%s0] sm:$0xff]
    %vm59 = vcmask 261120
    %v60 = vsel %vm59, %v58, 0.0
    %61 = vadd.xlane.f32.xlu0 %v60
    %v62 = vpop.xlane.xlu0 %61
    %v63 = vrcp.pop 32.0
    %v64 = vmul.f32 %v62, %v63
    %v65 = vsub.f32 %v58, %v64
    %v66 = vmul.f32 %v65, %v65
    %v67 = vsel %vm59, %v66, 0.0
    %68 = vadd.xlane.f32.xlu0 %v67
    %v69 = vpop.xlane.xlu0 %68
    %v70 = vmul.f32 %v69, %v63
    %v71 = vadd.f32 %v70, 1e-05
    %v72 = vrsqrt.pop %v71
    %v73 = vmul.f32 %v65, %v72
    %v74 = vld [vmem:[%s4] sm:$0x1]
    %v76 = vlaneseq
    %v77 = vshrl.u32 %v76, 7
    %v78 = vsub.s32 0, %v77
    %v79 = vrot.slane %v74, %v78
    %v81 = vmul.f32 %v73, %v79
    %v82 = vld [vmem:[%s5] sm:$0x1]
    %v84 = vlaneseq
    %v85 = vshrl.u32 %v84, 7
    %v86 = vsub.s32 0, %v85
    %v87 = vrot.slane %v82, %v86
    %v89 = vadd.f32 %v81, %v87
    %v90 = vld [vmem:[%s6] sm:$0xff]
    %v91 = vld [vmem:[%s6 + $0x8] sm:$0xff]
    %v92 = vld [vmem:[%s6 + $0x10] sm:$0xff]
    %v93 = vld [vmem:[%s6 + $0x18] sm:$0xff]
    %v94 = vld [vmem:[%s6 + $0x20] sm:$0xff]
    %v95 = vld [vmem:[%s6 + $0x28] sm:$0xff]
    %v96 = vld [vmem:[%s6 + $0x30] sm:$0xff]
    %v97 = vld [vmem:[%s6 + $0x38] sm:$0xff]
    %v98 = vld [vmem:[%s7] sm:$0x3]
    %v100 = vlaneseq
    %v101 = vshrl.u32 %v100, 7
    %v102 = vsub.s32 0, %v101
    %v103 = vrot.slane %v98, %v102
    %v104 = vlaneseq
    %v105 = vshrl.u32 %v104, 7
    %v106 = vsub.s32 1, %v105
    %v107 = vrot.slane %v98, %v106
    %v111 = vsel %vm59, %v89, 0
    %113 = vmatprep.subr.mxu0 0.0
    %114 = vmatpush1.msra.mxu0 0.0
    %115 = vmatprep.subr.mxu0 0.0
    %116 = vmatpush1.msra.mxu0 0.0
    %117 = vmatprep.subr.mxu0 0.0
    %118 = vmatpush1.msra.mxu0 0.0
    %119 = vmatprep.subr.mxu0 0.0
    %120 = vmatpush1.msra.mxu0 0.0
    %121 = vmatprep.subr.mxu0 0.0
    %122 = vmatpush1.msra.mxu0 0.0
    %123 = vmatprep.subr.mxu0 0.0
    %124 = vmatpush1.msra.mxu0 0.0
    %125 = vmatprep.subr.mxu0 0.0
    %126 = vmatpush1.msra.mxu0 0.0
    %127 = vmatprep.subr.mxu0 0.0
    %128 = vmatpush1.msra.mxu0 0.0
    %129 = vmatprep.subr.mxu0 0.0
    %130 = vmatpush1.msra.mxu0 0.0
    %131 = vmatprep.subr.mxu0 0.0
    %132 = vmatpush1.msra.mxu0 0.0
    %133 = vmatprep.subr.mxu0 0.0
    %134 = vmatpush1.msra.mxu0 0.0
    %135 = vmatprep.subr.mxu0 0.0
    %136 = vmatpush1.msra.mxu0 0.0
    %137 = vmatprep.subr.mxu0 %v97
    %138 = vmatpush1.msra.mxu0 %v96
    %139 = vmatprep.subr.mxu0 %v95
    %140 = vmatpush1.msra.mxu0 %v94
    %141 = vmatprep.subr.mxu0 %v93
    %142 = vmatpush1.msra.mxu0 %v92
    %143 = vmatprep.subr.mxu0 %v91
    %144 = vmatpush1.msra.mxu0 %v90
    %145 = vmatprep.subr.mxu0 0.0
    %146 = vmatpush2.msra.mxu0 0.0
    %147 = vmatprep.subr.mxu0 0.0
    %148 = vmatpush2.msra.mxu0 0.0
    %149 = vmatprep.subr.mxu0 0.0
    %150 = vmatpush2.msra.mxu0 0.0
    %151 = vmatprep.subr.mxu0 0.0
    %152 = vmatpush2.msra.mxu0 0.0
    %153 = vmatprep.subr.mxu0 0.0
    %154 = vmatpush2.msra.mxu0 0.0
    %155 = vmatprep.subr.mxu0 0.0
    %156 = vmatpush2.msra.mxu0 0.0
    %157 = vmatprep.subr.mxu0 0.0
    %158 = vmatpush2.msra.mxu0 0.0
    %159 = vmatprep.subr.mxu0 0.0
    %160 = vmatpush2.msra.mxu0 0.0
    %161 = vmatprep.subr.mxu0 0.0
    %162 = vmatpush2.msra.mxu0 0.0
    %163 = vmatprep.subr.mxu0 0.0
    %164 = vmatpush2.msra.mxu0 0.0
    %165 = vmatprep.subr.mxu0 0.0
    %166 = vmatpush2.msra.mxu0 0.0
    %167 = vmatprep.subr.mxu0 0.0
    %168 = vmatpush2.msra.mxu0 0.0
    %169 = vmatprep.subr.mxu0 0.0
    %170 = vmatpush2.msra.mxu0 0.0
    %171 = vmatprep.subr.mxu0 0.0
    %172 = vmatpush2.msra.mxu0 0.0
    %173 = vmatprep.subr.mxu0 0.0
    %174 = vmatpush2.msra.mxu0 0.0
    %175 = vmatprep.subr.mxu0 0.0
    %176 = vmatpush2.msra.mxu0 0.0
    %177 = vmatprep.mubr.f32.mxu0 0.0
    %178 = vmatmul.mubr.f32.gmra.mxu0 %v111
    %v179 = vpop.f32.mrf.mxu0
    %v180 = vadd.f32 %v103, %v179
    %v181 = vpop.f32.mrf.mxu0
    %v182 = vadd.f32 %v107, %v181
    %183 = vdwg.mxu0
    %v184 = vlaneseq
    %v185 = vand.u32 %v184, 127
    %vm186 = vcmp.ge.s32.totalorder %v185, 64
    %v187 = vxor.u32 %v180, 2147483648
    %v188 = vmul.f32 %v187, 1.442695
    %v189 = vpow.pop %v188
    %v190 = vadd.f32 %v189, 1.0
    %v191 = vrcp.pop %v190
    %v192 = vmul.f32 1.0, %v191
    %v193 = vmul.f32 %v180, %v192
    %v194 = vsel %vm186, %v193, %v180
    %v195 = vld [vmem:[%s8] sm:$0xff]
    %v196 = vld [vmem:[%s8 + $0x8] sm:$0xff]
    %v197 = vld [vmem:[%s8 + $0x10] sm:$0xff]
    %v198 = vld [vmem:[%s8 + $0x18] sm:$0xff]
    %v199 = vld [vmem:[%s8 + $0x20] sm:$0xff]
    %v200 = vld [vmem:[%s8 + $0x28] sm:$0xff]
    %v201 = vld [vmem:[%s8 + $0x30] sm:$0xff]
    %v202 = vld [vmem:[%s8 + $0x38] sm:$0xff]
    %v203 = vld [vmem:[%s8 + $0x40] sm:$0xff]
    %v204 = vld [vmem:[%s8 + $0x48] sm:$0xff]
    %v205 = vld [vmem:[%s8 + $0x50] sm:$0xff]
    %v206 = vld [vmem:[%s8 + $0x58] sm:$0xff]
    %v207 = vld [vmem:[%s8 + $0x60] sm:$0xff]
    %v208 = vld [vmem:[%s8 + $0x68] sm:$0xff]
    %v209 = vld [vmem:[%s8 + $0x70] sm:$0xff]
    %v210 = vld [vmem:[%s8 + $0x78] sm:$0xff]
    %v211 = vld [vmem:[%s8 + $0x80] sm:$0xff]
    %v212 = vld [vmem:[%s8 + $0x88] sm:$0xff]
    %v213 = vld [vmem:[%s8 + $0x90] sm:$0xff]
    %v214 = vld [vmem:[%s8 + $0x98] sm:$0xff]
    %v215 = vld [vmem:[%s8 + $0xa0] sm:$0xff]
    %v216 = vld [vmem:[%s8 + $0xa8] sm:$0xff]
    %v217 = vld [vmem:[%s8 + $0xb0] sm:$0xff]
    %v218 = vld [vmem:[%s8 + $0xb8] sm:$0xff]
    %v219 = vld [vmem:[%s8 + $0xc0] sm:$0xff]
    %v220 = vld [vmem:[%s8 + $0xc8] sm:$0xff]
    %v221 = vld [vmem:[%s8 + $0xd0] sm:$0xff]
    %v222 = vld [vmem:[%s8 + $0xd8] sm:$0xff]
    %v223 = vld [vmem:[%s8 + $0xe0] sm:$0xff]
    %v224 = vld [vmem:[%s8 + $0xe8] sm:$0xff]
    %v225 = vld [vmem:[%s8 + $0xf0] sm:$0xff]
    %v226 = vld [vmem:[%s8 + $0xf8] sm:$0xff]
    %v227 = vld [vmem:[%s9] sm:$0x3]
    %v229 = vlaneseq
    %v230 = vshrl.u32 %v229, 7
    %v231 = vsub.s32 0, %v230
    %v232 = vrot.slane %v227, %v231
    %v233 = vlaneseq
    %v234 = vshrl.u32 %v233, 7
    %v235 = vsub.s32 1, %v234
    %v236 = vrot.slane %v227, %v235
    %239 = vmatprep.subr.mxu0 %v226
    %240 = vmatpush1.msra.mxu0 %v225
    %241 = vmatprep.subr.mxu0 %v224
    %242 = vmatpush1.msra.mxu0 %v223
    %243 = vmatprep.subr.mxu0 %v222
    %244 = vmatpush1.msra.mxu0 %v221
    %245 = vmatprep.subr.mxu0 %v220
    %246 = vmatpush1.msra.mxu0 %v219
    %247 = vmatprep.subr.mxu0 %v218
    %248 = vmatpush1.msra.mxu0 %v217
    %249 = vmatprep.subr.mxu0 %v216
    %250 = vmatpush1.msra.mxu0 %v215
    %251 = vmatprep.subr.mxu0 %v214
    %252 = vmatpush1.msra.mxu0 %v213
    %253 = vmatprep.subr.mxu0 %v212
    %254 = vmatpush1.msra.mxu0 %v211
    %255 = vmatprep.subr.mxu0 %v210
    %256 = vmatpush1.msra.mxu0 %v209
    %257 = vmatprep.subr.mxu0 %v208
    %258 = vmatpush1.msra.mxu0 %v207
    %259 = vmatprep.subr.mxu0 %v206
    %260 = vmatpush1.msra.mxu0 %v205
    %261 = vmatprep.subr.mxu0 %v204
    %262 = vmatpush1.msra.mxu0 %v203
    %263 = vmatprep.subr.mxu0 %v202
    %264 = vmatpush1.msra.mxu0 %v201
    %265 = vmatprep.subr.mxu0 %v200
    %266 = vmatpush1.msra.mxu0 %v199
    %267 = vmatprep.subr.mxu0 %v198
    %268 = vmatpush1.msra.mxu0 %v197
    %269 = vmatprep.subr.mxu0 %v196
    %270 = vmatpush1.msra.mxu0 %v195
    %271 = vmatprep.subr.mxu0 0.0
    %272 = vmatpush2.msra.mxu0 0.0
    %273 = vmatprep.subr.mxu0 0.0
    %274 = vmatpush2.msra.mxu0 0.0
    %275 = vmatprep.subr.mxu0 0.0
    %276 = vmatpush2.msra.mxu0 0.0
    %277 = vmatprep.subr.mxu0 0.0
    %278 = vmatpush2.msra.mxu0 0.0
    %279 = vmatprep.subr.mxu0 0.0
    %280 = vmatpush2.msra.mxu0 0.0
    %281 = vmatprep.subr.mxu0 0.0
    %282 = vmatpush2.msra.mxu0 0.0
    %283 = vmatprep.subr.mxu0 0.0
    %284 = vmatpush2.msra.mxu0 0.0
    %285 = vmatprep.subr.mxu0 0.0
    %286 = vmatpush2.msra.mxu0 0.0
    %287 = vmatprep.subr.mxu0 0.0
    %288 = vmatpush2.msra.mxu0 0.0
    %289 = vmatprep.subr.mxu0 0.0
    %290 = vmatpush2.msra.mxu0 0.0
    %291 = vmatprep.subr.mxu0 0.0
    %292 = vmatpush2.msra.mxu0 0.0
    %293 = vmatprep.subr.mxu0 0.0
    %294 = vmatpush2.msra.mxu0 0.0
    %295 = vmatprep.subr.mxu0 0.0
    %296 = vmatpush2.msra.mxu0 0.0
    %297 = vmatprep.subr.mxu0 0.0
    %298 = vmatpush2.msra.mxu0 0.0
    %299 = vmatprep.subr.mxu0 0.0
    %300 = vmatpush2.msra.mxu0 0.0
    %301 = vmatprep.subr.mxu0 0.0
    %302 = vmatpush2.msra.mxu0 0.0
    %303 = vmatprep.mubr.f32.mxu0 0.0
    %304 = vmatmul.mubr.f32.gmra.mxu0 %v194
    %v305 = vpop.f32.mrf.mxu0
    %v306 = vadd.f32 %v232, %v305
    %v307 = vpop.f32.mrf.mxu0
    %v308 = vadd.f32 %v236, %v307
    %309 = vdwg.mxu0
    %v310 = vxor.u32 %v308, 2147483648
    %v311 = vmul.f32 %v310, 1.442695
    %v312 = vpow.pop %v311
    %v313 = vadd.f32 %v312, 1.0
    %v314 = vrcp.pop %v313
    %v315 = vmul.f32 1.0, %v314
    %v316 = vld [vmem:[%s3] sm:$0xff]
    %v317 = vadd.f32 %v308, %v316
    %319 = vrot.lane.b32.xlu0 %v306, 32
    %v320 = vpop.permute.xlu0 %319
    %v322 = vmax.f32 %v317, %v320
    %324 = vrot.lane.b32.xlu0 %v322, 96
    %v325 = vpop.permute.xlu0 %324
    %v327 = vsub.f32 %v306, %v325
    %v328 = vmul.f32 %v327, 1.442695
    %v329 = vpow.pop %v328
    %v330 = vsub.f32 %v317, %v322
    %v331 = vmul.f32 %v330, 1.442695
    %v332 = vpow.pop %v331
    %v333 = vld [vmem:[%s1] sm:$0xff]
    %v334 = vmul.f32 %v332, %v333
    %335 = vrot.lane.b32.xlu0 %v306, 96
    %v336 = vpop.permute.xlu0 %335
    %v338 = vmul.f32 %v308, %v336
    %340 = vrot.lane.b32.xlu0 %v338, 64
    %v341 = vpop.permute.xlu0 %340
    %v343 = vmul.f32 %v329, %v341
    %345 = vrot.lane.b32.xlu0 %v343, 32
    %v346 = vpop.permute.xlu0 %345
    %v348 = vadd.f32 %v334, %v346
    %v349 = vld [vmem:[%s2] sm:$0xff]
    %v350 = vmul.f32 %v332, %v349
    %v351 = vmul.f32 %v329, %v320
    %353 = vrot.lane.b32.xlu0 %v351, 32
    %v354 = vpop.permute.xlu0 %353
    %v356 = vadd.f32 %v350, %v354
    %357 = vxpose.xlu0.b32.start [1/16] %v336, 128
    %358 = vxpose.xlu0.b32.cont [2/16] 0.0, 128
    %359 = vxpose.xlu0.b32.cont [3/16] 0.0, 128
    %360 = vxpose.xlu0.b32.cont [4/16] 0.0, 128
    %361 = vxpose.xlu0.b32.cont [5/16] 0.0, 128
    %362 = vxpose.xlu0.b32.cont [6/16] 0.0, 128
    %363 = vxpose.xlu0.b32.cont [7/16] 0.0, 128
    %364 = vxpose.xlu0.b32.cont [8/16] 0.0, 128
    %365 = vxpose.xlu0.b32.cont [9/16] 0.0, 128
    %366 = vxpose.xlu0.b32.cont [10/16] 0.0, 128
    %367 = vxpose.xlu0.b32.cont [11/16] 0.0, 128
    %368 = vxpose.xlu0.b32.cont [12/16] 0.0, 128
    %369 = vxpose.xlu0.b32.cont [13/16] 0.0, 128
    %370 = vxpose.xlu0.b32.cont [14/16] 0.0, 128
    %371 = vxpose.xlu0.b32.cont [15/16] 0.0, 128
    %372 = vxpose.xlu0.b32.end [16/16] 0.0, 128
    %v373 = vpop.trf.xlu0
    %v374 = vpop.trf.xlu0
    %v375 = vpop.trf.xlu0
    %v376 = vpop.trf.xlu0
    %v377 = vpop.trf.xlu0
    %v378 = vpop.trf.xlu0
    %v379 = vpop.trf.xlu0
    %v380 = vpop.trf.xlu0
    %v381 = vpop.trf.xlu0
    %v382 = vpop.trf.xlu0
    %v383 = vpop.trf.xlu0
    %v384 = vpop.trf.xlu0
    %v385 = vpop.trf.xlu0
    %v386 = vpop.trf.xlu0
    %v387 = vpop.trf.xlu0
    %v388 = vpop.trf.xlu0
    %vm389 = vcmask 64512
    %v391 = vsel %vm389, %v373, 0
    %v394 = vsel %vm389, %v374, 0
    %v397 = vsel %vm389, %v375, 0
    %v400 = vsel %vm389, %v376, 0
    %402 = vmatprep.subr.mxu0 0.0
    %403 = vmatpush1.msra.mxu0 0.0
    %404 = vmatprep.subr.mxu0 0.0
    %405 = vmatpush1.msra.mxu0 0.0
    %406 = vmatprep.subr.mxu0 0.0
    %407 = vmatpush1.msra.mxu0 0.0
    %408 = vmatprep.subr.mxu0 0.0
    %409 = vmatpush1.msra.mxu0 0.0
    %410 = vmatprep.subr.mxu0 0.0
    %411 = vmatpush1.msra.mxu0 0.0
    %412 = vmatprep.subr.mxu0 0.0
    %413 = vmatpush1.msra.mxu0 0.0
    %414 = vmatprep.subr.mxu0 0.0
    %415 = vmatpush1.msra.mxu0 0.0
    %416 = vmatprep.subr.mxu0 0.0
    %417 = vmatpush1.msra.mxu0 0.0
    %418 = vmatprep.subr.mxu0 0.0
    %419 = vmatpush1.msra.mxu0 0.0
    %420 = vmatprep.subr.mxu0 0.0
    %421 = vmatpush1.msra.mxu0 0.0
    %422 = vmatprep.subr.mxu0 0.0
    %423 = vmatpush1.msra.mxu0 0.0
    %424 = vmatprep.subr.mxu0 0.0
    %425 = vmatpush1.msra.mxu0 0.0
    %426 = vmatprep.subr.mxu0 0.0
    %427 = vmatpush1.msra.mxu0 0.0
    %428 = vmatprep.subr.mxu0 0.0
    %429 = vmatpush1.msra.mxu0 0.0
    %430 = vmatprep.subr.mxu0 0.0
    %431 = vmatpush1.msra.mxu0 0.0
    %432 = vmatprep.subr.mxu0 0.0
    %433 = vmatpush1.msra.mxu0 %v356
    %434 = vmatprep.subr.mxu0 0.0
    %435 = vmatpush2.msra.mxu0 0.0
    %436 = vmatprep.subr.mxu0 0.0
    %437 = vmatpush2.msra.mxu0 0.0
    %438 = vmatprep.subr.mxu0 0.0
    %439 = vmatpush2.msra.mxu0 0.0
    %440 = vmatprep.subr.mxu0 0.0
    %441 = vmatpush2.msra.mxu0 0.0
    %442 = vmatprep.subr.mxu0 0.0
    %443 = vmatpush2.msra.mxu0 0.0
    %444 = vmatprep.subr.mxu0 0.0
    %445 = vmatpush2.msra.mxu0 0.0
    %446 = vmatprep.subr.mxu0 0.0
    %447 = vmatpush2.msra.mxu0 0.0
    %448 = vmatprep.subr.mxu0 0.0
    %449 = vmatpush2.msra.mxu0 0.0
    %450 = vmatprep.subr.mxu0 0.0
    %451 = vmatpush2.msra.mxu0 0.0
    %452 = vmatprep.subr.mxu0 0.0
    %453 = vmatpush2.msra.mxu0 0.0
    %454 = vmatprep.subr.mxu0 0.0
    %455 = vmatpush2.msra.mxu0 0.0
    %456 = vmatprep.subr.mxu0 0.0
    %457 = vmatpush2.msra.mxu0 0.0
    %458 = vmatprep.subr.mxu0 0.0
    %459 = vmatpush2.msra.mxu0 0.0
    %460 = vmatprep.subr.mxu0 0.0
    %461 = vmatpush2.msra.mxu0 0.0
    %462 = vmatprep.subr.mxu0 0.0
    %463 = vmatpush2.msra.mxu0 0.0
    %464 = vmatprep.subr.mxu0 0.0
    %465 = vmatpush2.msra.mxu0 0.0
    %466 = vmatprep.mubr.f32.mxu0 0.0
    %467 = vmatmul.mubr.f32.gmra.mxu0 %v391
    %v468 = vpop.f32.mrf.mxu0
    %v469 = vadd.f32 0.0, %v468
    %v470 = vpop.f32.mrf.mxu0
    %471 = vmatprep.mubr.f32.mxu0 0.0
    %472 = vmatmul.mubr.f32.gmra.mxu0 %v394
    %v473 = vpop.f32.mrf.mxu0
    %v474 = vadd.f32 0.0, %v473
    %v475 = vpop.f32.mrf.mxu0
    %476 = vmatprep.mubr.f32.mxu0 0.0
    %477 = vmatmul.mubr.f32.gmra.mxu0 %v397
    %v478 = vpop.f32.mrf.mxu0
    %v479 = vadd.f32 0.0, %v478
    %v480 = vpop.f32.mrf.mxu0
    %481 = vmatprep.mubr.f32.mxu0 0.0
    %482 = vmatmul.mubr.f32.gmra.mxu0 %v400
    %v483 = vpop.f32.mrf.mxu0
    %v484 = vadd.f32 0.0, %v483
    %v485 = vpop.f32.mrf.mxu0
    %486 = vdwg.mxu0
    %v487 = vand.u32 2147483647, %v469
    %v488 = vand.u32 2147483647, %v474
    %v489 = vand.u32 2147483647, %v479
    %v490 = vand.u32 2147483647, %v484
    %v491 = vsel %vm59, %v487, -inf
    %v492 = vsel %vm59, %v488, -inf
    %v493 = vsel %vm59, %v489, -inf
    %v494 = vsel %vm59, %v490, -inf
    %v495 = vmax.f32 %v491, %v492
    %v496 = vmax.f32 %v493, %v494
    %v497 = vmax.f32 %v495, %v496
    %v498 = vrot.slane %v497, 4
    %v499 = vmax.f32 %v497, %v498
    %v500 = vrot.slane %v499, 2
    %v501 = vmax.f32 %v499, %v500
    %v502 = vrot.slane %v501, 1
    %v503 = vmax.f32 %v501, %v502
    %v504 = vmul.f32 %v348, %v336
    %506 = vrot.lane.b32.xlu0 %v504, 64
    %v507 = vpop.permute.xlu0 %506
    %v509 = vmul.f32 %v315, %v507
    %511 = vrot.lane.b32.xlu0 %v503, 64
    %v512 = vpop.permute.xlu0 %511
    %v514 = vrcp.pop %v512
    %v515 = vmul.f32 %v509, %v514
    %v516 = vld [vmem:[%s10] sm:$0xff]
    %v517 = vld [vmem:[%s10 + $0x8] sm:$0xff]
    %v518 = vld [vmem:[%s10 + $0x10] sm:$0xff]
    %v519 = vld [vmem:[%s10 + $0x18] sm:$0xff]
    %521 = vrot.lane.b32.xlu0 %v515, 64
    %v522 = vpop.permute.xlu0 %521
    %v523 = vsel %vm59, %v522, 0
    %525 = vmatprep.subr.mxu0 0.0
    %526 = vmatpush1.msra.mxu0 0.0
    %527 = vmatprep.subr.mxu0 0.0
    %528 = vmatpush1.msra.mxu0 0.0
    %529 = vmatprep.subr.mxu0 0.0
    %530 = vmatpush1.msra.mxu0 0.0
    %531 = vmatprep.subr.mxu0 0.0
    %532 = vmatpush1.msra.mxu0 0.0
    %533 = vmatprep.subr.mxu0 0.0
    %534 = vmatpush1.msra.mxu0 0.0
    %535 = vmatprep.subr.mxu0 0.0
    %536 = vmatpush1.msra.mxu0 0.0
    %537 = vmatprep.subr.mxu0 0.0
    %538 = vmatpush1.msra.mxu0 0.0
    %539 = vmatprep.subr.mxu0 0.0
    %540 = vmatpush1.msra.mxu0 0.0
    %541 = vmatprep.subr.mxu0 0.0
    %542 = vmatpush1.msra.mxu0 0.0
    %543 = vmatprep.subr.mxu0 0.0
    %544 = vmatpush1.msra.mxu0 0.0
    %545 = vmatprep.subr.mxu0 0.0
    %546 = vmatpush1.msra.mxu0 0.0
    %547 = vmatprep.subr.mxu0 0.0
    %548 = vmatpush1.msra.mxu0 0.0
    %549 = vmatprep.subr.mxu0 0.0
    %550 = vmatpush1.msra.mxu0 %v519
    %551 = vmatprep.subr.mxu0 0.0
    %552 = vmatpush1.msra.mxu0 %v518
    %553 = vmatprep.subr.mxu0 0.0
    %554 = vmatpush1.msra.mxu0 %v517
    %555 = vmatprep.subr.mxu0 0.0
    %556 = vmatpush1.msra.mxu0 %v516
    %557 = vmatprep.subr.mxu0 0.0
    %558 = vmatpush2.msra.mxu0 0.0
    %559 = vmatprep.subr.mxu0 0.0
    %560 = vmatpush2.msra.mxu0 0.0
    %561 = vmatprep.subr.mxu0 0.0
    %562 = vmatpush2.msra.mxu0 0.0
    %563 = vmatprep.subr.mxu0 0.0
    %564 = vmatpush2.msra.mxu0 0.0
    %565 = vmatprep.subr.mxu0 0.0
    %566 = vmatpush2.msra.mxu0 0.0
    %567 = vmatprep.subr.mxu0 0.0
    %568 = vmatpush2.msra.mxu0 0.0
    %569 = vmatprep.subr.mxu0 0.0
    %570 = vmatpush2.msra.mxu0 0.0
    %571 = vmatprep.subr.mxu0 0.0
    %572 = vmatpush2.msra.mxu0 0.0
    %573 = vmatprep.subr.mxu0 0.0
    %574 = vmatpush2.msra.mxu0 0.0
    %575 = vmatprep.subr.mxu0 0.0
    %576 = vmatpush2.msra.mxu0 0.0
    %577 = vmatprep.subr.mxu0 0.0
    %578 = vmatpush2.msra.mxu0 0.0
    %579 = vmatprep.subr.mxu0 0.0
    %580 = vmatpush2.msra.mxu0 0.0
    %581 = vmatprep.subr.mxu0 0.0
    %582 = vmatpush2.msra.mxu0 0.0
    %583 = vmatprep.subr.mxu0 0.0
    %584 = vmatpush2.msra.mxu0 0.0
    %585 = vmatprep.subr.mxu0 0.0
    %586 = vmatpush2.msra.mxu0 0.0
    %587 = vmatprep.subr.mxu0 0.0
    %588 = vmatpush2.msra.mxu0 0.0
    %589 = vmatprep.mubr.f32.mxu0 0.0
    %590 = vmatmul.mubr.f32.gmra.mxu0 %v523
    %v591 = vpop.f32.mrf.mxu0
    %v592 = vadd.f32 0.0, %v591
    %v593 = vpop.f32.mrf.mxu0
    %594 = vdwg.mxu0
    %v595 = vmul.f32 %v515, %v515
    %597 = vrot.lane.b32.xlu0 %v595, 64
    %v598 = vpop.permute.xlu0 %597
    %v599 = vsel %vm59, %v598, 0
    %601 = vmatprep.subr.mxu0 0.0
    %602 = vmatpush1.msra.mxu0 0.0
    %603 = vmatprep.subr.mxu0 0.0
    %604 = vmatpush1.msra.mxu0 0.0
    %605 = vmatprep.subr.mxu0 0.0
    %606 = vmatpush1.msra.mxu0 0.0
    %607 = vmatprep.subr.mxu0 0.0
    %608 = vmatpush1.msra.mxu0 0.0
    %609 = vmatprep.subr.mxu0 0.0
    %610 = vmatpush1.msra.mxu0 0.0
    %611 = vmatprep.subr.mxu0 0.0
    %612 = vmatpush1.msra.mxu0 0.0
    %613 = vmatprep.subr.mxu0 0.0
    %614 = vmatpush1.msra.mxu0 0.0
    %615 = vmatprep.subr.mxu0 0.0
    %616 = vmatpush1.msra.mxu0 0.0
    %617 = vmatprep.subr.mxu0 0.0
    %618 = vmatpush1.msra.mxu0 0.0
    %619 = vmatprep.subr.mxu0 0.0
    %620 = vmatpush1.msra.mxu0 0.0
    %621 = vmatprep.subr.mxu0 0.0
    %622 = vmatpush1.msra.mxu0 0.0
    %623 = vmatprep.subr.mxu0 0.0
    %624 = vmatpush1.msra.mxu0 0.0
    %625 = vmatprep.subr.mxu0 0.0
    %626 = vmatpush1.msra.mxu0 %v519
    %627 = vmatprep.subr.mxu0 0.0
    %628 = vmatpush1.msra.mxu0 %v518
    %629 = vmatprep.subr.mxu0 0.0
    %630 = vmatpush1.msra.mxu0 %v517
    %631 = vmatprep.subr.mxu0 0.0
    %632 = vmatpush1.msra.mxu0 %v516
    %633 = vmatprep.subr.mxu0 0.0
    %634 = vmatpush2.msra.mxu0 0.0
    %635 = vmatprep.subr.mxu0 0.0
    %636 = vmatpush2.msra.mxu0 0.0
    %637 = vmatprep.subr.mxu0 0.0
    %638 = vmatpush2.msra.mxu0 0.0
    %639 = vmatprep.subr.mxu0 0.0
    %640 = vmatpush2.msra.mxu0 0.0
    %641 = vmatprep.subr.mxu0 0.0
    %642 = vmatpush2.msra.mxu0 0.0
    %643 = vmatprep.subr.mxu0 0.0
    %644 = vmatpush2.msra.mxu0 0.0
    %645 = vmatprep.subr.mxu0 0.0
    %646 = vmatpush2.msra.mxu0 0.0
    %647 = vmatprep.subr.mxu0 0.0
    %648 = vmatpush2.msra.mxu0 0.0
    %649 = vmatprep.subr.mxu0 0.0
    %650 = vmatpush2.msra.mxu0 0.0
    %651 = vmatprep.subr.mxu0 0.0
    %652 = vmatpush2.msra.mxu0 0.0
    %653 = vmatprep.subr.mxu0 0.0
    %654 = vmatpush2.msra.mxu0 0.0
    %655 = vmatprep.subr.mxu0 0.0
    %656 = vmatpush2.msra.mxu0 0.0
    %657 = vmatprep.subr.mxu0 0.0
    %658 = vmatpush2.msra.mxu0 0.0
    %659 = vmatprep.subr.mxu0 0.0
    %660 = vmatpush2.msra.mxu0 0.0
    %661 = vmatprep.subr.mxu0 0.0
    %662 = vmatpush2.msra.mxu0 0.0
    %663 = vmatprep.subr.mxu0 0.0
    %664 = vmatpush2.msra.mxu0 0.0
    %665 = vmatprep.mubr.f32.mxu0 0.0
    %666 = vmatmul.mubr.f32.gmra.mxu0 %v599
    %v667 = vpop.f32.mrf.mxu0
    %v668 = vadd.f32 0.0, %v667
    %v669 = vpop.f32.mrf.mxu0
    %670 = vdwg.mxu0
    %v671 = vmul.f32 %v592, %v592
    %v672 = vsub.f32 %v668, %v671
    %674 = vrot.lane.b32.xlu0 %v592, 64
    %v675 = vpop.permute.xlu0 %674
    %v677 = vsub.f32 %v515, %v675
    %v678 = vadd.f32 %v672, 1e-05
    %v679 = vrsqrt.pop %v678
    %681 = vrot.lane.b32.xlu0 %v679, 64
    %v682 = vpop.permute.xlu0 %681
    %v684 = vmul.f32 %v677, %v682
    %v685 = vld [vmem:[%s11] sm:$0x1]
    %v687 = vlaneseq
    %v688 = vshrl.u32 %v687, 7
    %v689 = vsub.s32 0, %v688
    %v690 = vrot.slane %v685, %v689
    %691 = vrot.lane.b32.xlu0 %v690, 64
    %v692 = vpop.permute.xlu0 %691
    %v694 = vmul.f32 %v684, %v692
    %v695 = vld [vmem:[%s12] sm:$0x1]
    %v697 = vlaneseq
    %v698 = vshrl.u32 %v697, 7
    %v699 = vsub.s32 0, %v698
    %v700 = vrot.slane %v695, %v699
    %701 = vrot.lane.b32.xlu0 %v700, 64
    %v702 = vpop.permute.xlu0 %701
    %v704 = vadd.f32 %v694, %v702
    %705 = vrot.lane.b32.xlu0 %v306, 64
    %v706 = vpop.permute.xlu0 %705
    %v708 = vadd.f32 %v704, %v706
    %v709 = vxor.u32 %v182, 2147483648
    %v710 = vmul.f32 %v709, 1.442695
    %v711 = vpow.pop %v710
    %v712 = vadd.f32 %v711, 1.0
    %v713 = vrcp.pop %v712
    %v714 = vmul.f32 1.0, %v713
    %v715 = vmul.f32 %v182, %v714
    %717 = vrot.lane.b32.xlu0 %v715, 64
    %v718 = vpop.permute.xlu0 %717
    %v720 = vmul.f32 %v708, %v718
    %v721 = vld [vmem:[%s13] sm:$0xff]
    %v722 = vld [vmem:[%s13 + $0x8] sm:$0xff]
    %v723 = vld [vmem:[%s13 + $0x10] sm:$0xff]
    %v724 = vld [vmem:[%s13 + $0x18] sm:$0xff]
    %v725 = vld [vmem:[%s14] sm:$0x1]
    %v727 = vlaneseq
    %v728 = vshrl.u32 %v727, 7
    %v729 = vsub.s32 0, %v728
    %v730 = vrot.slane %v725, %v729
    %733 = vrot.lane.b32.xlu0 %v720, 64
    %v734 = vpop.permute.xlu0 %733
    %v735 = vsel %vm59, %v734, 0
    %737 = vmatprep.subr.mxu0 0.0
    %738 = vmatpush1.msra.mxu0 0.0
    %739 = vmatprep.subr.mxu0 0.0
    %740 = vmatpush1.msra.mxu0 0.0
    %741 = vmatprep.subr.mxu0 0.0
    %742 = vmatpush1.msra.mxu0 0.0
    %743 = vmatprep.subr.mxu0 0.0
    %744 = vmatpush1.msra.mxu0 0.0
    %745 = vmatprep.subr.mxu0 0.0
    %746 = vmatpush1.msra.mxu0 0.0
    %747 = vmatprep.subr.mxu0 0.0
    %748 = vmatpush1.msra.mxu0 0.0
    %749 = vmatprep.subr.mxu0 0.0
    %750 = vmatpush1.msra.mxu0 0.0
    %751 = vmatprep.subr.mxu0 0.0
    %752 = vmatpush1.msra.mxu0 0.0
    %753 = vmatprep.subr.mxu0 0.0
    %754 = vmatpush1.msra.mxu0 0.0
    %755 = vmatprep.subr.mxu0 0.0
    %756 = vmatpush1.msra.mxu0 0.0
    %757 = vmatprep.subr.mxu0 0.0
    %758 = vmatpush1.msra.mxu0 0.0
    %759 = vmatprep.subr.mxu0 0.0
    %760 = vmatpush1.msra.mxu0 0.0
    %761 = vmatprep.subr.mxu0 0.0
    %762 = vmatpush1.msra.mxu0 %v724
    %763 = vmatprep.subr.mxu0 0.0
    %764 = vmatpush1.msra.mxu0 %v723
    %765 = vmatprep.subr.mxu0 0.0
    %766 = vmatpush1.msra.mxu0 %v722
    %767 = vmatprep.subr.mxu0 0.0
    %768 = vmatpush1.msra.mxu0 %v721
    %769 = vmatprep.subr.mxu0 0.0
    %770 = vmatpush2.msra.mxu0 0.0
    %771 = vmatprep.subr.mxu0 0.0
    %772 = vmatpush2.msra.mxu0 0.0
    %773 = vmatprep.subr.mxu0 0.0
    %774 = vmatpush2.msra.mxu0 0.0
    %775 = vmatprep.subr.mxu0 0.0
    %776 = vmatpush2.msra.mxu0 0.0
    %777 = vmatprep.subr.mxu0 0.0
    %778 = vmatpush2.msra.mxu0 0.0
    %779 = vmatprep.subr.mxu0 0.0
    %780 = vmatpush2.msra.mxu0 0.0
    %781 = vmatprep.subr.mxu0 0.0
    %782 = vmatpush2.msra.mxu0 0.0
    %783 = vmatprep.subr.mxu0 0.0
    %784 = vmatpush2.msra.mxu0 0.0
    %785 = vmatprep.subr.mxu0 0.0
    %786 = vmatpush2.msra.mxu0 0.0
    %787 = vmatprep.subr.mxu0 0.0
    %788 = vmatpush2.msra.mxu0 0.0
    %789 = vmatprep.subr.mxu0 0.0
    %790 = vmatpush2.msra.mxu0 0.0
    %791 = vmatprep.subr.mxu0 0.0
    %792 = vmatpush2.msra.mxu0 0.0
    %793 = vmatprep.subr.mxu0 0.0
    %794 = vmatpush2.msra.mxu0 0.0
    %795 = vmatprep.subr.mxu0 0.0
    %796 = vmatpush2.msra.mxu0 0.0
    %797 = vmatprep.subr.mxu0 0.0
    %798 = vmatpush2.msra.mxu0 0.0
    %799 = vmatprep.subr.mxu0 0.0
    %800 = vmatpush2.msra.mxu0 0.0
    %801 = vmatprep.mubr.f32.mxu0 0.0
    %802 = vmatmul.mubr.f32.gmra.mxu0 %v735
    %v803 = vpop.f32.mrf.mxu0
    %v804 = vadd.f32 %v730, %v803
    %v805 = vpop.f32.mrf.mxu0
    %806 = vdwg.mxu0
    %v807 = vadd.f32 %v804, %v58
    %808 = vst.msk [vmem:[#allocation2] sm:$0xff] %vm59, %v807
    %810 = vst.msk [vmem:[#allocation4] sm:$0xff] %vm59, %v522
    %811 = vst.msk [vmem:[#allocation6] sm:$0xff] %vm59, %v348
    %812 = vst.msk [vmem:[#allocation7] sm:$0xff] %vm59, %v356
    %813 = vst.msk [vmem:[#allocation9] sm:$0xff] %vm59, %v322
    // Predicated region
    $region62: #{mlstm_forward.1} parent=1 // pred_check
      _
    $region63: #{mlstm_forward.1} parent=1 // pred_check_branch
      %815 = sbr.rel (0) target = $region65
    $region64: #{mlstm_forward.1} parent=1 // pred_region
      %s817 = ssub.s32 128, 128
      %818 = vsyncadd [#allocation3], %s817
      %s820 = sshll.u32 [#allocation2], 4
      %s821 = int_to_ptr.vmem [resolvable:$true] %s820
      %823 = dma.vmem_to_hbm [thread:$0]  %s821, 128, %s15, [#allocation3]
    $region65: #{mlstm_forward.1} parent=1 // pred_fallthru
      _
    // Predicated region
    $region66: #{mlstm_forward.1} parent=1 // pred_check
      _
    $region67: #{mlstm_forward.1} parent=1 // pred_check_branch
      %825 = sbr.rel (0) target = $region69
    $region68: #{mlstm_forward.1} parent=1 // pred_region
      %s827 = ssub.s32 128, 128
      %828 = vsyncadd [#allocation5], %s827
      %s830 = sshll.u32 [#allocation4], 4
      %s831 = int_to_ptr.vmem [resolvable:$true] %s830
      %833 = dma.vmem_to_hbm [thread:$0]  %s831, 128, %s16, [#allocation5]
    $region69: #{mlstm_forward.1} parent=1 // pred_fallthru
      _
    // Predicated region
    $region70: #{mlstm_forward.1} parent=1 // pred_check
      _
    $region71: #{mlstm_forward.1} parent=1 // pred_check_branch
      %835 = sbr.rel (0) target = $region73
    $region72: #{mlstm_forward.1} parent=1 // pred_region
      %s837 = ssub.s32 128, 128
      %838 = vsyncadd [#allocation5], %s837
      %s840 = sshll.u32 [#allocation6], 4
      %s841 = int_to_ptr.vmem [resolvable:$true] %s840
      %843 = dma.vmem_to_hbm [thread:$0]  %s841, 128, %s17, [#allocation5]
    $region73: #{mlstm_forward.1} parent=1 // pred_fallthru
      _
    // Predicated region
    $region74: #{mlstm_forward.1} parent=1 // pred_check
      _
    $region75: #{mlstm_forward.1} parent=1 // pred_check_branch
      %845 = sbr.rel (0) target = $region77
    $region76: #{mlstm_forward.1} parent=1 // pred_region
      %s847 = ssub.s32 128, 128
      %848 = vsyncadd [#allocation8], %s847
      %s850 = sshll.u32 [#allocation7], 4
      %s851 = int_to_ptr.vmem [resolvable:$true] %s850
      %853 = dma.vmem_to_hbm [thread:$0]  %s851, 128, %s18, [#allocation8]
    $region77: #{mlstm_forward.1} parent=1 // pred_fallthru
      _
    // Predicated region
    $region78: #{mlstm_forward.1} parent=1 // pred_check
      _
    $region79: #{mlstm_forward.1} parent=1 // pred_check_branch
      %855 = sbr.rel (0) target = $region81
    $region80: #{mlstm_forward.1} parent=1 // pred_region
      %s857 = ssub.s32 128, 128
      %858 = vsyncadd [#allocation8], %s857
      %s860 = sshll.u32 [#allocation9], 4
      %s861 = int_to_ptr.vmem [resolvable:$true] %s860
      %863 = dma.vmem_to_hbm [thread:$0]  %s861, 128, %s19, [#allocation8]
    $region81: #{mlstm_forward.1} parent=1 // pred_fallthru
      _
    // Predicated region
    $region82: #{mlstm_forward.1} parent=1 // pred_check
      _
    $region83: #{mlstm_forward.1} parent=1 // pred_check_branch
      %865 = sbr.rel (0) target = $region85
    $region84: #{mlstm_forward.1} parent=1 // pred_region
      %866 = dma.done [#allocation3], 128
    $region85: #{mlstm_forward.1} parent=1 // pred_fallthru
      _
    // Predicated region
    $region86: #{mlstm_forward.1} parent=1 // pred_check
      _
    $region87: #{mlstm_forward.1} parent=1 // pred_check_branch
      %868 = sbr.rel (0) target = $region89
    $region88: #{mlstm_forward.1} parent=1 // pred_region
      %869 = dma.done [#allocation5], 128
    $region89: #{mlstm_forward.1} parent=1 // pred_fallthru
      _
    // Predicated region
    $region90: #{mlstm_forward.1} parent=1 // pred_check
      _
    $region91: #{mlstm_forward.1} parent=1 // pred_check_branch
      %871 = sbr.rel (0) target = $region93
    $region92: #{mlstm_forward.1} parent=1 // pred_region
      %872 = dma.done [#allocation5], 128
    $region93: #{mlstm_forward.1} parent=1 // pred_fallthru
      _
    // Predicated region
    $region94: #{mlstm_forward.1} parent=1 // pred_check
      _
    $region95: #{mlstm_forward.1} parent=1 // pred_check_branch
      %874 = sbr.rel (0) target = $region97
    $region96: #{mlstm_forward.1} parent=1 // pred_region
      %875 = dma.done [#allocation8], 128
    $region97: #{mlstm_forward.1} parent=1 // pred_fallthru
      _
    // Predicated region
    $region98: #{mlstm_forward.1} parent=1 // pred_check
      _
    $region99: #{mlstm_forward.1} parent=1 // pred_check_branch
      %877 = sbr.rel (0) target = $region101
    $region100: #{mlstm_forward.1} parent=1 // pred_region
      %878 = dma.done [#allocation8], 128
    $region101: #{mlstm_forward.1} parent=1 // pred_fallthru
      _
    %879 = vsyncpa [#allocation3], 1
    %880 = vsyncpa [#allocation5], 1
    %881 = vsyncpa [#allocation8], 1

</llo_original>
